<compile_context>
chip_gen: v7x
topology: tpu7x:2x2x1
jax: 0.10.0
libtpu: 0.0.40
codegen_flags: <defaults>
</compile_context>

<pallas_src>
import functools

import jax
import jax.numpy as jnp
from jax.experimental import pallas as pl
from jax.experimental.pallas import tpu as pltpu

_LANE = 128


# ---------------- kernels ----------------

def _tv_map_kernel(x_ref, o_ref, *, ny):
    # x_ref, o_ref: (B, S) with S = Nx*Ny (row-major flattened spatial).
    x = x_ref[...]
    s = x.shape[-1]
    # down[k]  = x[k + ny]  (next row, same column)  -- wraps past the last row
    # right[k] = x[k + 1]   (same row, next column)  -- wraps at each row end
    down = pltpu.roll(x, s - ny, 1)
    right = pltpu.roll(x, s - 1, 1)
    dx = x - down
    dy = x - right
    # Full-width, lane-dense store; wrap-around entries sliced off in wrapper.
    o_ref[...] = jnp.sqrt(dx * dx + dy * dy + 1e-8).astype(o_ref.dtype)


def _tv_sum_kernel(x_ref, mx_ref, my_ref, o_ref, *, ny):
    # x_ref: (B, S); mx_ref/my_ref: (1, S) validity masks; o_ref: (B, 128).
    x = x_ref[...].astype(jnp.float32)
    s = x.shape[-1]
    down = pltpu.roll(x, s - ny, 1)
    right = pltpu.roll(x, s - 1, 1)
    tv = (jnp.sum(jnp.abs(down - x) * mx_ref[...], axis=-1, keepdims=True)
          + jnp.sum(jnp.abs(right - x) * my_ref[...], axis=-1, keepdims=True))
    o_ref[...] = jnp.broadcast_to(tv, o_ref.shape).astype(o_ref.dtype)


# ---------------- wrapper ----------------

def _pick_block_rows(bc, row_bytes, target_bytes=2 << 20):
    """Rows per block: multiple of 8, ~target_bytes payload, and >=2 grid
    steps when there is enough work (so both v7x TensorCores get blocks)."""
    bc8 = ((bc + 7) // 8) * 8
    b = max(8, (target_bytes // max(row_bytes, 1)) // 8 * 8)
    b = min(b, bc8)
    if b == bc8 and bc8 >= 16:
        b = ((bc8 // 2) + 7) // 8 * 8
    return b


def tv_map(x, do_sqrt=True):
    """x: (N, C, Nx, Ny). Matches TV_map.forward."""
    N, C, Nx, Ny = x.shape
    BC, S = N * C, Nx * Ny
    xf = x.reshape(BC, S)

    B = _pick_block_rows(BC, S * x.dtype.itemsize)
    grid = -(-BC // B)            # cdiv
    BC_pad = grid * B
    if BC_pad != BC:
        xf = jnp.pad(xf, ((0, BC_pad - BC), (0, 0)))

    block_bytes = B * S * x.dtype.itemsize
    vmem_limit = min(48 * 1024 * 1024, max(32 * 1024 * 1024, 6 * block_bytes))
    cparams = pltpu.CompilerParams(
        dimension_semantics=("parallel",),
        vmem_limit_bytes=vmem_limit)

    if do_sqrt:
        out_flat = pl.pallas_call(
            functools.partial(_tv_map_kernel, ny=Ny),
            out_shape=jax.ShapeDtypeStruct((BC_pad, S), x.dtype),
            grid_spec=pltpu.PrefetchScalarGridSpec(
                num_scalar_prefetch=0,
                grid=(grid,),
                in_specs=[pl.BlockSpec((B, S), lambda i: (i, 0))],
                out_specs=pl.BlockSpec((B, S), lambda i: (i, 0))),
            compiler_params=cparams,
        )(xf)
        out = out_flat[:BC].reshape(N, C, Nx, Ny)
        return out[:, :, :Nx - 1, :Ny - 1]
    else:
        # Validity masks (built host-side; avoids vector int mod in-kernel).
        k = jnp.arange(S, dtype=jnp.int32)
        mask_x = (k < (Nx - 1) * Ny).astype(jnp.float32).reshape(1, S)
        mask_y = ((k % Ny) != (Ny - 1)).astype(jnp.float32).reshape(1, S)
        out = pl.pallas_call(
            functools.partial(_tv_sum_kernel, ny=Ny),
            out_shape=jax.ShapeDtypeStruct((BC_pad, _LANE), jnp.float32),
            grid_spec=pltpu.PrefetchScalarGridSpec(
                num_scalar_prefetch=0,
                grid=(grid,),
                in_specs=[pl.BlockSpec((B, S), lambda i: (i, 0)),
                          pl.BlockSpec((1, S), lambda i: (0, 0)),
                          pl.BlockSpec((1, S), lambda i: (0, 0))],
                out_specs=pl.BlockSpec((B, _LANE), lambda i: (i, 0))),
            compiler_params=cparams,
        )(xf, mask_x, mask_y)
        return out[:BC, 0].reshape(N, C).astype(x.dtype)


# ---------------- pure-JAX reference ----------------

def tv_map_ref(x, do_sqrt=True):
    _, _, Nx, Ny = x.shape
    if do_sqrt:
        dx = x[:, :, 0:Nx - 1, :-1] - x[:, :, 1:Nx, :-1]
        dy = x[:, :, :-1, 0:Ny - 1] - x[:, :, :-1, 1:Ny]
        return jnp.sqrt(dx * dx + dy * dy + 1e-8)
    else:
        xx = x[:, :, 1:, :] - x[:, :, :-1, :]
        yy = x[:, :, :, 1:] - x[:, :, :, :-1]
        return (jnp.sum(jnp.abs(xx), axis=(-2, -1))
                + jnp.sum(jnp.abs(yy), axis=(-2, -1)))


if __name__ == "__main__":
    key = jax.random.PRNGKey(0)
    x = jax.random.normal(key, (2, 4, 16, 16), dtype=jnp.float32)

    # do_sqrt=True (module default)
    y = jax.block_until_ready(tv_map(x, do_sqrt=True))
    y_ref = tv_map_ref(x, do_sqrt=True)
    assert y.shape == (2, 4, 15, 15), y.shape
    assert jnp.allclose(y, y_ref, atol=1e-5, rtol=1e-5)

    # do_sqrt=False branch
    z = jax.block_until_ready(tv_map(x, do_sqrt=False))
    z_ref = tv_map_ref(x, do_sqrt=False)
    assert z.shape == (2, 4), z.shape
    assert jnp.allclose(z, z_ref, atol=1e-4, rtol=1e-5)

    print("KERNEL_OK")
</pallas_src>

<mosaic_0001>
module attributes {stable_mosaic.version = 11 : i64} {
  func.func @_tv_map_kernel(%arg0: i32, %arg1: memref<8x256xf32, #tpu.memory_space<vmem>>, %arg2: memref<8x256xf32, #tpu.memory_space<vmem>>) attributes {dimension_semantics = [#tpu.dimension_semantics<parallel>], iteration_bounds = array<i64: 1>, scalar_prefetch = 0 : i64, scratch_operands = 0 : i64, tpu.core_type = #tpu.core_type<tc>, window_params = [{transform_indices = @transform_0, window_bounds = array<i64: 8, 256>}, {transform_indices = @transform_1, window_bounds = array<i64: 8, 256>}]} {
    %c0 = arith.constant 0 : index
    %c0_0 = arith.constant 0 : index
    %0 = vector.load %arg1[%c0, %c0_0] : memref<8x256xf32, #tpu.memory_space<vmem>>, vector<8x256xf32>
    %c240_i32 = arith.constant 240 : i32
    %1 = tpu.dynamic_rotate %0 by %c240_i32 dim 1 : vector<8x256xf32>, i32 -> vector<8x256xf32>
    %c255_i32 = arith.constant 255 : i32
    %2 = tpu.dynamic_rotate %0 by %c255_i32 dim 1 : vector<8x256xf32>, i32 -> vector<8x256xf32>
    %3 = arith.subf %0, %1 : vector<8x256xf32>
    %4 = arith.subf %0, %2 : vector<8x256xf32>
    %5 = arith.mulf %3, %3 : vector<8x256xf32>
    %6 = arith.mulf %4, %4 : vector<8x256xf32>
    %7 = arith.addf %5, %6 : vector<8x256xf32>
    %cst = arith.constant 9.99999993E-9 : f32
    %8 = vector.broadcast %cst : f32 to vector<8x256xf32>
    %9 = arith.addf %7, %8 : vector<8x256xf32>
    %10 = math.sqrt %9 : vector<8x256xf32>
    %c0_1 = arith.constant 0 : index
    %c0_2 = arith.constant 0 : index
    %11 = vector.load %arg2[%c0_1, %c0_2] : memref<8x256xf32, #tpu.memory_space<vmem>>, vector<8x256xf32>
    tpu.vector_store %arg2[%c0_1, %c0_2], %10 {strides = array<i32>} : memref<8x256xf32, #tpu.memory_space<vmem>>, vector<8x256xf32>,
    return
  }
  func.func @transform_0(%arg0: i32) -> (i32, i32) {
    %c0_i32 = arith.constant 0 : i32
    %c0_i32_0 = arith.constant 0 : i32
    return %arg0, %c0_i32 : i32, i32
  }
  func.func @transform_1(%arg0: i32) -> (i32, i32) {
    %c0_i32 = arith.constant 0 : i32
    %c0_i32_0 = arith.constant 0 : i32
    return %arg0, %c0_i32 : i32, i32
  }
}

</mosaic_0001>

<llo_original>
// kernel: tpu_custom_call.1
$region0: #{tpu_custom_call.1}
  #allocation0 [shape = 'u32[]', space=smem, size = 0x4, offset = 0x4, fixed_abs, tag = 'smem constant byte address 0x4 - core index']
  #allocation1 [shape = 'u32[144,128]{1,0:T(1,128)}', space=vmem, size = 0x12000, scoped, tag = 'internal scratch']
  %s0 = inlined_call_operand.hbm [shape: f32[8,256], index: 0, kind: input, shape index: {}]
  %s1 = inlined_call_operand.hbm [shape: f32[8,256], index: 1, kind: output, shape index: {}]
  %s2 = sld [smem:[#allocation0]]
  $region18: #{tpu_custom_call.1} parent=0
    _
  %s4 = ssub.s32 1, %s2
  %s5 = scalar_select 0, %s4, %s2
  $region1: #{tpu_custom_call.1} parent=0
    #allocation2 [shape = 'u8[8192]{0}', space=vmem, size = 0x2000, scoped, tag = 'input window, operand 0, single buffered']
    #allocation3 [shape = 's32[1]{0}', space=sflag, size = 0x4, scoped, tag = 'scoped memory for tpu_custom_call.1']
    #allocation4 [shape = 's32[1]{0}', space=sflag, size = 0x4, scoped, tag = 'scoped memory for tpu_custom_call.1']
    #allocation5 [shape = 'u8[8192]{0}', space=vmem, size = 0x2000, scoped, tag = 'output window, operand 0, single buffered']
    %6 = vsyncpa [#allocation3], 0
    %7 = vsyncpa [#allocation4], 0
    // Predicated region
    $region2: #{tpu_custom_call.1} parent=1 // pred_check
      _
    $region3: #{tpu_custom_call.1} parent=1 // pred_check_branch
      %9 = sbr.rel (0) target = $region5
    $region4: #{tpu_custom_call.1} parent=1 // pred_region
      %s11 = ssub.s32 256, 256
      %12 = vsyncadd [#allocation3], %s11
      %s14 = sshll.u32 [#allocation2], 4
      %s15 = int_to_ptr.vmem [resolvable:$true] %s14
      %17 = dma.hbm_to_vmem [thread:$0]  %s0, 256, %s15, [#allocation3]
    $region5: #{tpu_custom_call.1} parent=1 // pred_fallthru
      _
    // Predicated region
    $region6: #{tpu_custom_call.1} parent=1 // pred_check
      _
    $region7: #{tpu_custom_call.1} parent=1 // pred_check_branch
      %19 = sbr.rel (0) target = $region9
    $region8: #{tpu_custom_call.1} parent=1 // pred_region
      %20 = dma.done [#allocation3], 256
    $region9: #{tpu_custom_call.1} parent=1 // pred_fallthru
      _
    %v21 = vld [vmem:[#allocation2] sm:$0xff]
    %v22 = vld [vmem:[#allocation2 + $0x8] sm:$0xff]
    %23 = vrot.lane.b32.xlu0 %v21, 112
    %v24 = vpop.permute.xlu0 %23
    %25 = vrot.lane.b32.xlu0 %v22, 112
    %v26 = vpop.permute.xlu0 %25
    %v27 = vlaneseq
    %v28 = vand.u32 %v27, 127
    %vm29 = vcmp.lt.s32.totalorder %v28, 112
    %v30 = vsel %vm29, %v24, %v26
    %v31 = vsel %vm29, %v26, %v24
    %32 = vrot.lane.b32.xlu0 %v21, 127
    %v33 = vpop.permute.xlu0 %32
    %34 = vrot.lane.b32.xlu0 %v22, 127
    %v35 = vpop.permute.xlu0 %34
    %vm36 = vcmp.lt.s32.totalorder %v28, 127
    %v37 = vsel %vm36, %v33, %v35
    %v38 = vsel %vm36, %v35, %v33
    %v39 = vsub.f32 %v21, %v30
    %v40 = vsub.f32 %v22, %v31
    %v41 = vsub.f32 %v21, %v37
    %v42 = vsub.f32 %v22, %v38
    %v43 = vmul.f32 %v39, %v39
    %v44 = vmul.f32 %v40, %v40
    %v45 = vmul.f32 %v41, %v41
    %v46 = vmul.f32 %v42, %v42
    %v47 = vadd.f32 %v43, %v45
    %v48 = vadd.f32 %v44, %v46
    %v49 = vadd.f32 %v47, 1e-08
    %v50 = vadd.f32 %v48, 1e-08
    %v51 = vrsqrt.pop %v49
    %v52 = vmul.f32 %v49, %v51
    %vm53 = vcmp.eq.f32.partialorder %v49, inf
    %v54 = vsel %vm53, %v49, %v52
    %vm55 = vcmp.eq.f32.partialorder %v49, 0.0
    %v56 = vand.u32 %v49, 2147483648
    %v57 = vsel %vm55, %v56, %v54
    %v58 = vrsqrt.pop %v50
    %v59 = vmul.f32 %v50, %v58
    %vm60 = vcmp.eq.f32.partialorder %v50, inf
    %v61 = vsel %vm60, %v50, %v59
    %vm62 = vcmp.eq.f32.partialorder %v50, 0.0
    %v63 = vand.u32 %v50, 2147483648
    %v64 = vsel %vm62, %v63, %v61
    %65 = vst [vmem:[#allocation5] sm:$0xff] %v57
    %66 = vst [vmem:[#allocation5 + $0x8] sm:$0xff] %v64
    // Predicated region
    $region10: #{tpu_custom_call.1} parent=1 // pred_check
      _
    $region11: #{tpu_custom_call.1} parent=1 // pred_check_branch
      %68 = sbr.rel (0) target = $region13
    $region12: #{tpu_custom_call.1} parent=1 // pred_region
      %s70 = ssub.s32 256, 256
      %71 = vsyncadd [#allocation4], %s70
      %s73 = sshll.u32 [#allocation5], 4
      %s74 = int_to_ptr.vmem [resolvable:$true] %s73
      %76 = dma.vmem_to_hbm [thread:$0]  %s74, 256, %s1, [#allocation4]
    $region13: #{tpu_custom_call.1} parent=1 // pred_fallthru
      _
    // Predicated region
    $region14: #{tpu_custom_call.1} parent=1 // pred_check
      _
    $region15: #{tpu_custom_call.1} parent=1 // pred_check_branch
      %78 = sbr.rel (0) target = $region17
    $region16: #{tpu_custom_call.1} parent=1 // pred_region
      %79 = dma.done [#allocation4], 256
    $region17: #{tpu_custom_call.1} parent=1 // pred_fallthru
      _
    %80 = vsyncpa [#allocation3], 1
    %81 = vsyncpa [#allocation4], 1

</llo_original>
